<compile_context>
chip_gen: v6e
topology: v6e:2x2x1
jax: 0.10.0
libtpu: 0.0.40
codegen_flags: <defaults>
</compile_context>

<pallas_src>
import jax
import jax.numpy as jnp
from jax.experimental import pallas as pl
from jax.experimental.pallas import tpu as pltpu


_LANE = 128
_MAX_CHUNKS = 4              # at most this many concurrent DMAs per copy
_MIN_CHUNK_BYTES = 1 << 20   # don't split copies below ~1 MiB per chunk


def _resolve_size(numel, size):
    """Resolve a torch-style `size` tuple that may contain a single -1."""
    size = tuple(int(s) for s in size)
    if -1 in size:
        known = 1
        for s in size:
            if s != -1:
                known *= s
        assert known > 0 and numel % known == 0, (
            "view size incompatible with number of elements")
        size = tuple(numel // known if s == -1 else s for s in size)
    prod = 1
    for s in size:
        prod *= s
    assert prod == numel, "view size incompatible with number of elements"
    return size


def _plan_chunks(rows, lane_w, itemsize):
    """Static (start, nrows) chunks over the slab's leading axis.

    Chunk starts are aligned to the packed (sublane, 128) tiling so each DMA
    begins on a tile boundary; the last chunk absorbs any remainder.
    """
    total_bytes = rows * lane_w * itemsize
    sub = 8 * max(1, 4 // max(1, itemsize))   # f32 -> 8, bf16 -> 16, int8 -> 32
    if rows < 2 * sub or total_bytes < 2 * _MIN_CHUNK_BYTES:
        return [(0, rows)]
    n_chunks = int(min(_MAX_CHUNKS, rows // sub, total_bytes // _MIN_CHUNK_BYTES))
    n_chunks = max(1, n_chunks)
    base = max(sub, (rows // n_chunks) // sub * sub)
    chunks = []
    start = 0
    while len(chunks) < n_chunks - 1 and start + base < rows:
        chunks.append((start, base))
        start += base
    chunks.append((start, rows - start))
    return chunks


def _make_dma_copy_kernel(chunks):
    """HBM->HBM identity copy: one async DMA per (static) row chunk."""
    whole = len(chunks) == 1

    def kernel(src_hbm, dst_hbm, sems):
        if whole:
            cp = pltpu.make_async_copy(src_hbm, dst_hbm, sems.at[0])
            cp.start()
            cp.wait()
            return
        copies = []
        for c, (r0, nr) in enumerate(chunks):
            cp = pltpu.make_async_copy(src_hbm.at[pl.ds(r0, nr)],
                                       dst_hbm.at[pl.ds(r0, nr)],
                                       sems.at[c])
            cp.start()
            copies.append(cp)
        for cp in copies:
            cp.wait()

    return kernel


def pallas_view(x, size, *, materialize=True):
    """Equivalent of `x.view(size)`; data pass done as HBM->HBM Pallas DMA."""
    numel = int(x.size)
    out_size = _resolve_size(numel, size)

    if not materialize or numel == 0:
        # Metadata-only path: the exact (zero-cost) torch .view() equivalent.
        return jnp.reshape(x, out_size)

    itemsize = jnp.dtype(x.dtype).itemsize
    total_bytes = numel * itemsize

    # Widest lane-dense slab width that divides numel -> long contiguous DMA
    # bursts.  HBM->HBM DMA has no (8,128) BlockSpec constraint, so awkward
    # element counts just copy as a flat 1-D buffer.
    lane_w = None
    for cand in (32768, 16384, 8192, 4096, 2048, 1024, 512, 256, _LANE):
        if numel % cand == 0:
            lane_w = cand
            break

    if lane_w is not None:
        rows = numel // lane_w
        slab = jnp.reshape(x, (rows, lane_w))       # metadata-only
        chunks = _plan_chunks(rows, lane_w, itemsize)
    else:
        slab = jnp.reshape(x, (numel,))             # metadata-only
        chunks = [(0, numel)]

    copied = pl.pallas_call(
        _make_dma_copy_kernel(chunks),
        out_shape=jax.ShapeDtypeStruct(slab.shape, slab.dtype),
        in_specs=[pl.BlockSpec(memory_space=pl.ANY)],
        out_specs=pl.BlockSpec(memory_space=pl.ANY),
        scratch_shapes=[pltpu.SemaphoreType.DMA((len(chunks),))],
        cost_estimate=pl.CostEstimate(flops=0, transcendentals=0,
                                      bytes_accessed=2 * total_bytes),
    )(slab)

    # Final reshape to the requested view size (metadata-only glue).
    return jnp.reshape(copied, out_size)


class View:
    """JAX/Pallas counterpart of the PyTorch View module."""

    def __init__(self, size):
        self.size = size

    def __call__(self, tensor):
        return pallas_view(tensor, self.size)


if __name__ == "__main__":
    key = jax.random.PRNGKey(0)

    # NCHW input, as produced by PyTorch conv layers.
    x = jax.random.normal(key, (2, 4, 16, 16), dtype=jnp.float32)
    view_mod = View((-1, 4 * 16 * 16))
    y = jax.block_until_ready(view_mod(x))
    ref = jnp.reshape(x, (2, 4 * 16 * 16))
    assert y.shape == (2, 1024), y.shape
    assert y.dtype == x.dtype
    assert bool(jnp.array_equal(y, ref))

    # bf16 path.
    xb = jax.random.normal(jax.random.PRNGKey(1), (2, 4, 16, 16),
                           dtype=jnp.bfloat16)
    yb = jax.block_until_ready(View((2, -1))(xb))
    assert yb.shape == (2, 1024)
    assert bool(jnp.array_equal(yb, jnp.reshape(xb, (2, 1024))))

    # Awkward element count (not a multiple of 128) -> flat 1-D DMA copy.
    xo = jax.random.normal(jax.random.PRNGKey(2), (2, 3, 5, 7),
                           dtype=jnp.float32)
    yo = jax.block_until_ready(View((-1, 35))(xo))
    assert yo.shape == (6, 35)
    assert bool(jnp.array_equal(yo, jnp.reshape(xo, (6, 35))))

    # Larger buffer (2 MiB) -> exercises the multi-chunk concurrent-DMA path.
    xl = jax.random.normal(jax.random.PRNGKey(3), (8, 64, 1024),
                           dtype=jnp.float32)
    yl = jax.block_until_ready(View((-1, 1024))(xl))
    assert yl.shape == (512, 1024)
    assert bool(jnp.array_equal(yl, jnp.reshape(xl, (512, 1024))))

    print("KERNEL_OK")
</pallas_src>

<mosaic_0001>
module attributes {stable_mosaic.version = 11 : i64} {
  func.func @kernel(%arg0: memref<1x2048xf32, #tpu.memory_space<any>>, %arg1: memref<1x2048xf32, #tpu.memory_space<any>>, %arg2: memref<1x!tpu.dma_semaphore, #tpu.memory_space<semaphore_mem>>) attributes {dimension_semantics = [], scalar_prefetch = 0 : i64, scratch_operands = 1 : i64, tpu.core_type = #tpu.core_type<tc>} {
    %c0_i32 = arith.constant 0 : i32
    %0 = tpu.memref_slice %arg2[%c0_i32] : memref<1x!tpu.dma_semaphore, #tpu.memory_space<semaphore_mem>> -> memref<1x!tpu.dma_semaphore, #tpu.memory_space<semaphore_mem>>
    %1 = tpu.memref_squeeze %0 : memref<1x!tpu.dma_semaphore, #tpu.memory_space<semaphore_mem>> -> memref<!tpu.dma_semaphore, #tpu.memory_space<semaphore_mem>>
    tpu.enqueue_dma source(%arg0 : memref<1x2048xf32, #tpu.memory_space<any>>) target(%arg1 : memref<1x2048xf32, #tpu.memory_space<any>>) target_semaphore(%1 : memref<!tpu.dma_semaphore, #tpu.memory_space<semaphore_mem>>)
    %c0_i32_0 = arith.constant 0 : i32
    %2 = tpu.memref_slice %arg2[%c0_i32_0] : memref<1x!tpu.dma_semaphore, #tpu.memory_space<semaphore_mem>> -> memref<1x!tpu.dma_semaphore, #tpu.memory_space<semaphore_mem>>
    %3 = tpu.memref_squeeze %2 : memref<1x!tpu.dma_semaphore, #tpu.memory_space<semaphore_mem>> -> memref<!tpu.dma_semaphore, #tpu.memory_space<semaphore_mem>>
    tpu.wait_dma2 semaphore(%3 : memref<!tpu.dma_semaphore, #tpu.memory_space<semaphore_mem>>) src(%arg0 : memref<1x2048xf32, #tpu.memory_space<any>>) dst(%arg1 : memref<1x2048xf32, #tpu.memory_space<any>>)
    return
  }
}

</mosaic_0001>

<llo_original>
// kernel: tpu_custom_call.1
$region0: #{tpu_custom_call.1}
  #allocation0 [shape = 'u32[]', space=smem, size = 0x4, offset = 0x4, fixed_abs, tag = 'smem constant byte address 0x4 - core index']
  #allocation1 [shape = 'u32[144,128]{1,0:T(1,128)}', space=vmem, size = 0x12000, scoped, tag = 'internal scratch']
  #allocation2 [shape = 's32[1]{0}', space=sflag, size = 0x4, scoped, tag = 'scratch operand']
  #allocation3 [shape = 's32[]', space=sflag, size = 0x4, offset = 0, fixed_abs, tag = 'sflag constant byte address 0x0 - dummy sync flag']
  #allocation4 [shape = 'u32[0]{0}', space=smem, size = 0, offset = 0, fixed_abs, tag = 'smem constant byte address 0x0 - null']
  %s0 = inlined_call_operand.hbm [shape: f32[1,2048], index: 0, kind: input, shape index: {}]
  %s1 = inlined_call_operand.hbm [shape: f32[1,2048], index: 1, kind: output, shape index: {}]
  %s2 = sld [smem:[#allocation0]]
  $region2: #{tpu_custom_call.1} parent=0
    _
  %s4 = ssub.s32 1, %s2
  %s5 = scalar_select 0, %s4, %s2
  %s7 = sshll.u32 1, 14
  %s8 = sxor.u32 4294967295, %s7
  %12 = dma.general %s0, 256, %s1, [#allocation2], 131072, [#allocation4], 0, 0
  %s13 = smul.u32 1, 16
  %s14 = sshll.u32 %s13, 4
  %15 = dma.done [#allocation2], %s14
  %16 = vsyncmov [#allocation2]
  %s17 = vpop.sfrf %16
  %p18 = scmp.eq.s32.totalorder %s17, 0
  %p19 = pneg %p18
  %21 = shalt.err (%p19)

</llo_original>
